<compile_context>
chip_gen: v5e
topology: v5e:2x2
jax: 0.10.0
libtpu: 0.0.40
codegen_flags: <defaults>
</compile_context>

<pallas_src>
import functools

import jax
import jax.numpy as jnp
from jax import lax
from jax.experimental import pallas as pl
from jax.experimental.pallas import tpu as pltpu


# ---------------------------------------------------------------------------
# Kernel: grid = (pass, time-tile)
#   pass 0: accumulate per-channel BN statistics (sum, sum of squares)
#   pass 1: recompute conv, fold BN into scale/shift, add residual, ReLU
# ---------------------------------------------------------------------------
def _residual_kernel(w_ref, gamma_ref, beta_ref, x_ref, y_ref, out_ref,
                     sum_ref, ssq_ref, scale_ref, shift_ref,
                     *, inv_n: float, eps: float):
    p = pl.program_id(0)          # 0 = stats pass, 1 = normalize/apply pass
    t = pl.program_id(1)          # time tile

    B, Cin, _ = x_ref.shape
    Cout = w_ref.shape[0]

    # 1x1 Conv1d (no bias) as a batched MXU matmul with f32 accumulation.
    # Recomputed in both passes: x has only Cin rows, so re-reading it is far
    # cheaper than spilling the (Cout, B*T) conv output to HBM.
    w_b = jnp.broadcast_to(w_ref[...].astype(jnp.float32)[None, :, :],
                           (B, Cout, Cin))
    s = lax.dot_general(w_b, x_ref[...].astype(jnp.float32),
                        dimension_numbers=(((2,), (1,)), ((0,), (0,))),
                        preferred_element_type=jnp.float32)     # (B, Cout, Tt)

    @pl.when(p == 0)
    def _stats_pass():
        @pl.when(t == 0)
        def _init():
            sum_ref[...] = jnp.zeros_like(sum_ref)
            ssq_ref[...] = jnp.zeros_like(ssq_ref)
        # Zero-padded time columns contribute exactly 0 to both sums; dividing
        # by the true element count keeps the statistics exact.
        ts = jnp.sum(s, axis=2, keepdims=True)                  # lane reduce
        tq = jnp.sum(s * s, axis=2, keepdims=True)
        sum_ref[...] += jnp.sum(ts, axis=0, keepdims=True)      # (1, Cout, 1)
        ssq_ref[...] += jnp.sum(tq, axis=0, keepdims=True)

    @pl.when(p == 1)
    def _apply_pass():
        @pl.when(t == 0)
        def _finalize_stats():
            mean = sum_ref[...] * inv_n
            var = jnp.maximum(ssq_ref[...] * inv_n - mean * mean, 0.0)  # biased
            inv_std = lax.rsqrt(var + eps)
            scale = gamma_ref[...] * inv_std
            scale_ref[...] = scale
            shift_ref[...] = beta_ref[...] - mean * scale
        y = y_ref[...].astype(jnp.float32)
        out = jnp.maximum(y + s * scale_ref[...] + shift_ref[...], 0.0)
        out_ref[...] = out.astype(out_ref.dtype)


# ---------------------------------------------------------------------------
# Wrapper
# ---------------------------------------------------------------------------
def residual_forward(x, y, w, gamma, beta, eps=1e-5, tile_t=None):
    """x: (B, Cin, T), y: (B, Cout, T), w: (Cout, Cin) [or (Cout, Cin, 1)],
    gamma/beta: (Cout,). Returns relu(y + BN(conv1x1(x))) in (B, Cout, T)."""
    B, Cin, T = x.shape
    Cout = gamma.shape[0]
    assert y.shape == (B, Cout, T)
    w2 = w.reshape(Cout, Cin)              # squeeze torch's trailing kernel dim
    out_dtype = y.dtype

    # ---- time tiling -------------------------------------------------------
    # Small T: single full-width tile (no padding, no extra HBM copies).
    # Large T: lane-dense tiles (multiple of 128), sized so each (B, Cout, Tt)
    # f32 slab is ~2 MiB -> per-step VMEM (double-buffered y/out blocks + f32
    # temporaries) fits v5e's 16 MiB scoped default and v7x's 64 MiB physical.
    if tile_t is None:
        budget_cols = max(128, ((2 << 20) // (4 * B * Cout)) // 128 * 128)
        tile_t = T if T <= budget_cols else budget_cols
    num_tiles = pl.cdiv(T, tile_t)
    Tp = num_tiles * tile_t
    if Tp != T:                            # zero-pad; masked out of BN stats
        x = jnp.pad(x, ((0, 0), (0, 0), (0, Tp - T)))
        y = jnp.pad(y, ((0, 0), (0, 0), (0, Tp - T)))

    gamma3 = gamma.reshape(1, Cout, 1).astype(jnp.float32)
    beta3 = beta.reshape(1, Cout, 1).astype(jnp.float32)

    kernel = functools.partial(_residual_kernel,
                               inv_n=1.0 / float(B * T), eps=float(eps))

    # Explicit VMEM budget (double-buffered x/y/out tiles + f32 temporaries).
    itemsize = max(x.dtype.itemsize, y.dtype.itemsize, 4)
    blk_bytes = B * tile_t * (Cin + 2 * Cout) * itemsize
    tmp_bytes = 3 * B * Cout * tile_t * 4
    vmem_limit = int(min(40 << 20, max(16 << 20, 2 * blk_bytes + tmp_bytes + (1 << 20))))

    out = pl.pallas_call(
        kernel,
        out_shape=jax.ShapeDtypeStruct((B, Cout, Tp), out_dtype),
        grid=(2, num_tiles),               # (pass, time-tile), both sequential
        in_specs=[
            pl.BlockSpec((Cout, Cin), lambda p, t: (0, 0)),               # w
            pl.BlockSpec((1, Cout, 1), lambda p, t: (0, 0, 0)),           # gamma
            pl.BlockSpec((1, Cout, 1), lambda p, t: (0, 0, 0)),           # beta
            pl.BlockSpec((B, Cin, tile_t), lambda p, t: (0, 0, t)),       # x
            pl.BlockSpec((B, Cout, tile_t), lambda p, t: (0, 0, t * p)),  # y
        ],
        out_specs=pl.BlockSpec((B, Cout, tile_t), lambda p, t: (0, 0, t * p)),
        scratch_shapes=[
            pltpu.VMEM((1, Cout, 1), jnp.float32),   # sum(s)
            pltpu.VMEM((1, Cout, 1), jnp.float32),   # sum(s*s)
            pltpu.VMEM((1, Cout, 1), jnp.float32),   # folded BN scale
            pltpu.VMEM((1, Cout, 1), jnp.float32),   # folded BN shift
        ],
        input_output_aliases={4: 0},       # out reuses y's HBM buffer (y is dead)
        compiler_params=pltpu.CompilerParams(
            dimension_semantics=("arbitrary", "arbitrary"),
            vmem_limit_bytes=vmem_limit,
        ),
    )(w2, gamma3, beta3, x, y)

    return out[:, :, :T] if Tp != T else out


# ---------------------------------------------------------------------------
# Pure-JAX reference (sanity check)
# ---------------------------------------------------------------------------
def residual_ref(x, y, w, gamma, beta, eps=1e-5):
    w2 = w.reshape(gamma.shape[0], x.shape[1])
    skip = jnp.einsum("oc,bct->bot", w2, x)                      # 1x1 conv, no bias
    mean = skip.mean(axis=(0, 2), keepdims=True)                 # training-mode BN
    var = ((skip - mean) ** 2).mean(axis=(0, 2), keepdims=True)  # biased variance
    skip = (skip - mean) / jnp.sqrt(var + eps)
    skip = skip * gamma[None, :, None] + beta[None, :, None]
    return jnp.maximum(y + skip, 0.0)


if __name__ == "__main__":
    # Module config: Residual(input_size=4, filters=8) -> Conv1d(4 -> 32, k=1), BN(32)
    B, Cin, filters, T = 2, 4, 8, 16
    Cout = 4 * filters

    key = jax.random.PRNGKey(0)
    kx, ky, kw, kg, kb = jax.random.split(key, 5)

    x = jax.random.normal(kx, (B, Cin, T), dtype=jnp.float32)
    y = jax.random.normal(ky, (B, Cout, T), dtype=jnp.float32)
    # torch Conv1d weight is (Cout, Cin, 1) -> squeezed to (Cout, Cin)
    w = jax.random.normal(kw, (Cout, Cin), dtype=jnp.float32) * 0.5
    gamma = 1.0 + 0.1 * jax.random.normal(kg, (Cout,), dtype=jnp.float32)
    beta = 0.1 * jax.random.normal(kb, (Cout,), dtype=jnp.float32)

    fwd = jax.jit(residual_forward)
    out = jax.block_until_ready(fwd(x, y, w, gamma, beta))
    ref = residual_ref(x, y, w, gamma, beta)
    assert out.shape == (B, Cout, T)
    assert jnp.allclose(out, ref, atol=1e-4, rtol=1e-4), "small-shape mismatch"

    # Also exercise the tiled / padded multi-tile path (T not a multiple of the
    # lane tile): padded columns must not corrupt the BN statistics.
    T2 = 300
    x2 = jax.random.normal(kx, (B, Cin, T2), dtype=jnp.float32)
    y2 = jax.random.normal(ky, (B, Cout, T2), dtype=jnp.float32)
    fwd2 = jax.jit(functools.partial(residual_forward, tile_t=128))
    out2 = jax.block_until_ready(fwd2(x2, y2, w, gamma, beta))
    ref2 = residual_ref(x2, y2, w, gamma, beta)
    assert out2.shape == (B, Cout, T2)
    assert jnp.allclose(out2, ref2, atol=1e-4, rtol=1e-4), "tiled-path mismatch"

    print("KERNEL_OK")
</pallas_src>

<mosaic_0001>
module attributes {stable_mosaic.version = 11 : i64} {
  func.func @_residual_kernel(%arg0: i32, %arg1: i32, %arg2: memref<32x4xf32, #tpu.memory_space<vmem>>, %arg3: memref<1x32x1xf32, #tpu.memory_space<vmem>>, %arg4: memref<1x32x1xf32, #tpu.memory_space<vmem>>, %arg5: memref<2x4x16xf32, #tpu.memory_space<vmem>>, %arg6: memref<2x32x16xf32, #tpu.memory_space<vmem>>, %arg7: memref<2x32x16xf32, #tpu.memory_space<vmem>>, %arg8: memref<1x32x1xf32, #tpu.memory_space<vmem>>, %arg9: memref<1x32x1xf32, #tpu.memory_space<vmem>>, %arg10: memref<1x32x1xf32, #tpu.memory_space<vmem>>, %arg11: memref<1x32x1xf32, #tpu.memory_space<vmem>>) attributes {dimension_semantics = [#tpu.dimension_semantics<arbitrary>, #tpu.dimension_semantics<arbitrary>], iteration_bounds = array<i64: 2, 1>, scalar_prefetch = 0 : i64, scratch_operands = 4 : i64, tpu.core_type = #tpu.core_type<tc>, window_params = [{pipeline_mode = #tpu.pipeline_mode<synchronous>, transform_indices = @transform_0, window_bounds = array<i64: 32, 4>}, {pipeline_mode = #tpu.pipeline_mode<synchronous>, transform_indices = @transform_1, window_bounds = array<i64: 1, 32, 1>}, {pipeline_mode = #tpu.pipeline_mode<synchronous>, transform_indices = @transform_2, window_bounds = array<i64: 1, 32, 1>}, {transform_indices = @transform_3, window_bounds = array<i64: 2, 4, 16>}, {transform_indices = @transform_4, window_bounds = array<i64: 2, 32, 16>}, {transform_indices = @transform_5, window_bounds = array<i64: 2, 32, 16>}]} {
    %c0 = arith.constant 0 : index
    %c0_0 = arith.constant 0 : index
    %0 = vector.load %arg2[%c0, %c0_0] : memref<32x4xf32, #tpu.memory_space<vmem>>, vector<32x4xf32>
    %1 = vector.shape_cast %0 : vector<32x4xf32> to vector<1x32x4xf32>
    %2 = vector.shape_cast %1 : vector<1x32x4xf32> to vector<1x32x4xf32>
    %3 = vector.broadcast %2 : vector<1x32x4xf32> to vector<2x32x4xf32>
    %c0_1 = arith.constant 0 : index
    %c0_2 = arith.constant 0 : index
    %c0_3 = arith.constant 0 : index
    %4 = vector.load %arg5[%c0_1, %c0_2, %c0_3] : memref<2x4x16xf32, #tpu.memory_space<vmem>>, vector<2x4x16xf32>
    %cst = arith.constant dense<0.000000e+00> : vector<2x32x16xf32>
    %5 = tpu.matmul %3, %4, %cst {dimension_numbers = #tpu.dot_dimension_numbers<[2], [1], [1], [2], [0, 0, 0, 1, 1, 2], [0], [0]>} : vector<2x32x4xf32>, vector<2x4x16xf32>, vector<2x32x16xf32> -> vector<2x32x16xf32>
    %c0_i32 = arith.constant 0 : i32
    %6 = arith.cmpi eq, %arg0, %c0_i32 : i32
    %7 = arith.extui %6 : i1 to i32
    %c0_i32_4 = arith.constant 0 : i32
    %8 = arith.cmpi ne, %7, %c0_i32_4 : i32
    scf.if %8 {
      %c0_i32_6 = arith.constant 0 : i32
      %12 = arith.cmpi eq, %arg1, %c0_i32_6 : i32
      %13 = arith.extui %12 : i1 to i32
      %c0_i32_7 = arith.constant 0 : i32
      %14 = arith.cmpi ne, %13, %c0_i32_7 : i32
      scf.if %14 {
        %cst_24 = arith.constant 0.000000e+00 : f32
        %30 = vector.broadcast %cst_24 : f32 to vector<1x32x1xf32>
        %c0_25 = arith.constant 0 : index
        %c0_26 = arith.constant 0 : index
        %c0_27 = arith.constant 0 : index
        %31 = vector.load %arg8[%c0_25, %c0_26, %c0_27] : memref<1x32x1xf32, #tpu.memory_space<vmem>>, vector<1x32x1xf32>
        tpu.vector_store %arg8[%c0_25, %c0_26, %c0_27], %30 {strides = array<i32>} : memref<1x32x1xf32, #tpu.memory_space<vmem>>, vector<1x32x1xf32>,
        %cst_28 = arith.constant 0.000000e+00 : f32
        %32 = vector.broadcast %cst_28 : f32 to vector<1x32x1xf32>
        %c0_29 = arith.constant 0 : index
        %c0_30 = arith.constant 0 : index
        %c0_31 = arith.constant 0 : index
        %33 = vector.load %arg9[%c0_29, %c0_30, %c0_31] : memref<1x32x1xf32, #tpu.memory_space<vmem>>, vector<1x32x1xf32>
        tpu.vector_store %arg9[%c0_29, %c0_30, %c0_31], %32 {strides = array<i32>} : memref<1x32x1xf32, #tpu.memory_space<vmem>>, vector<1x32x1xf32>,
      } else {
      }
      %cst_8 = arith.constant dense<0.000000e+00> : vector<2x32xf32>
      %15 = vector.multi_reduction <add>, %5, %cst_8 [2] : vector<2x32x16xf32> to vector<2x32xf32>
      %16 = vector.shape_cast %15 : vector<2x32xf32> to vector<2x32x1xf32>
      %17 = arith.mulf %5, %5 : vector<2x32x16xf32>
      %cst_9 = arith.constant dense<0.000000e+00> : vector<2x32xf32>
      %18 = vector.multi_reduction <add>, %17, %cst_9 [2] : vector<2x32x16xf32> to vector<2x32xf32>
      %19 = vector.shape_cast %18 : vector<2x32xf32> to vector<2x32x1xf32>
      %c0_10 = arith.constant 0 : index
      %c0_11 = arith.constant 0 : index
      %c0_12 = arith.constant 0 : index
      %20 = vector.load %arg8[%c0_10, %c0_11, %c0_12] : memref<1x32x1xf32, #tpu.memory_space<vmem>>, vector<1x32x1xf32>
      %cst_13 = arith.constant dense<0.000000e+00> : vector<32x1xf32>
      %21 = vector.multi_reduction <add>, %16, %cst_13 [0] : vector<2x32x1xf32> to vector<32x1xf32>
      %22 = vector.shape_cast %21 : vector<32x1xf32> to vector<1x32x1xf32>
      %23 = arith.addf %20, %22 : vector<1x32x1xf32>
      %c0_14 = arith.constant 0 : index
      %c0_15 = arith.constant 0 : index
      %c0_16 = arith.constant 0 : index
      %24 = vector.load %arg8[%c0_14, %c0_15, %c0_16] : memref<1x32x1xf32, #tpu.memory_space<vmem>>, vector<1x32x1xf32>
      tpu.vector_store %arg8[%c0_14, %c0_15, %c0_16], %23 {strides = array<i32>} : memref<1x32x1xf32, #tpu.memory_space<vmem>>, vector<1x32x1xf32>,
      %c0_17 = arith.constant 0 : index
      %c0_18 = arith.constant 0 : index
      %c0_19 = arith.constant 0 : index
      %25 = vector.load %arg9[%c0_17, %c0_18, %c0_19] : memref<1x32x1xf32, #tpu.memory_space<vmem>>, vector<1x32x1xf32>
      %cst_20 = arith.constant dense<0.000000e+00> : vector<32x1xf32>
      %26 = vector.multi_reduction <add>, %19, %cst_20 [0] : vector<2x32x1xf32> to vector<32x1xf32>
      %27 = vector.shape_cast %26 : vector<32x1xf32> to vector<1x32x1xf32>
      %28 = arith.addf %25, %27 : vector<1x32x1xf32>
      %c0_21 = arith.constant 0 : index
      %c0_22 = arith.constant 0 : index
      %c0_23 = arith.constant 0 : index
      %29 = vector.load %arg9[%c0_21, %c0_22, %c0_23] : memref<1x32x1xf32, #tpu.memory_space<vmem>>, vector<1x32x1xf32>
      tpu.vector_store %arg9[%c0_21, %c0_22, %c0_23], %28 {strides = array<i32>} : memref<1x32x1xf32, #tpu.memory_space<vmem>>, vector<1x32x1xf32>,
    } else {
    }
    %c1_i32 = arith.constant 1 : i32
    %9 = arith.cmpi eq, %arg0, %c1_i32 : i32
    %10 = arith.extui %9 : i1 to i32
    %c0_i32_5 = arith.constant 0 : i32
    %11 = arith.cmpi ne, %10, %c0_i32_5 : i32
    scf.if %11 {
      %c0_i32_6 = arith.constant 0 : i32
      %12 = arith.cmpi eq, %arg1, %c0_i32_6 : i32
      %13 = arith.extui %12 : i1 to i32
      %c0_i32_7 = arith.constant 0 : i32
      %14 = arith.cmpi ne, %13, %c0_i32_7 : i32
      scf.if %14 {
        %c0_21 = arith.constant 0 : index
        %c0_22 = arith.constant 0 : index
        %c0_23 = arith.constant 0 : index
        %26 = vector.load %arg8[%c0_21, %c0_22, %c0_23] : memref<1x32x1xf32, #tpu.memory_space<vmem>>, vector<1x32x1xf32>
        %cst_24 = arith.constant 3.125000e-02 : f32
        %27 = vector.broadcast %cst_24 : f32 to vector<1x32x1xf32>
        %28 = arith.mulf %26, %27 : vector<1x32x1xf32>
        %c0_25 = arith.constant 0 : index
        %c0_26 = arith.constant 0 : index
        %c0_27 = arith.constant 0 : index
        %29 = vector.load %arg9[%c0_25, %c0_26, %c0_27] : memref<1x32x1xf32, #tpu.memory_space<vmem>>, vector<1x32x1xf32>
        %cst_28 = arith.constant 3.125000e-02 : f32
        %30 = vector.broadcast %cst_28 : f32 to vector<1x32x1xf32>
        %31 = arith.mulf %29, %30 : vector<1x32x1xf32>
        %32 = arith.mulf %28, %28 : vector<1x32x1xf32>
        %33 = arith.subf %31, %32 : vector<1x32x1xf32>
        %cst_29 = arith.constant 0.000000e+00 : f32
        %34 = vector.broadcast %cst_29 : f32 to vector<1x32x1xf32>
        %35 = arith.maximumf %33, %34 : vector<1x32x1xf32>
        %cst_30 = arith.constant 9.99999974E-6 : f32
        %36 = vector.broadcast %cst_30 : f32 to vector<1x32x1xf32>
        %37 = arith.addf %35, %36 : vector<1x32x1xf32>
        %38 = math.rsqrt %37 : vector<1x32x1xf32>
        %c0_31 = arith.constant 0 : index
        %c0_32 = arith.constant 0 : index
        %c0_33 = arith.constant 0 : index
        %39 = vector.load %arg3[%c0_31, %c0_32, %c0_33] : memref<1x32x1xf32, #tpu.memory_space<vmem>>, vector<1x32x1xf32>
        %40 = arith.mulf %39, %38 : vector<1x32x1xf32>
        %c0_34 = arith.constant 0 : index
        %c0_35 = arith.constant 0 : index
        %c0_36 = arith.constant 0 : index
        %41 = vector.load %arg10[%c0_34, %c0_35, %c0_36] : memref<1x32x1xf32, #tpu.memory_space<vmem>>, vector<1x32x1xf32>
        tpu.vector_store %arg10[%c0_34, %c0_35, %c0_36], %40 {strides = array<i32>} : memref<1x32x1xf32, #tpu.memory_space<vmem>>, vector<1x32x1xf32>,
        %c0_37 = arith.constant 0 : index
        %c0_38 = arith.constant 0 : index
        %c0_39 = arith.constant 0 : index
        %42 = vector.load %arg4[%c0_37, %c0_38, %c0_39] : memref<1x32x1xf32, #tpu.memory_space<vmem>>, vector<1x32x1xf32>
        %43 = arith.mulf %28, %40 : vector<1x32x1xf32>
        %44 = arith.subf %42, %43 : vector<1x32x1xf32>
        %c0_40 = arith.constant 0 : index
        %c0_41 = arith.constant 0 : index
        %c0_42 = arith.constant 0 : index
        %45 = vector.load %arg11[%c0_40, %c0_41, %c0_42] : memref<1x32x1xf32, #tpu.memory_space<vmem>>, vector<1x32x1xf32>
        tpu.vector_store %arg11[%c0_40, %c0_41, %c0_42], %44 {strides = array<i32>} : memref<1x32x1xf32, #tpu.memory_space<vmem>>, vector<1x32x1xf32>,
      } else {
      }
      %c0_8 = arith.constant 0 : index
      %c0_9 = arith.constant 0 : index
      %c0_10 = arith.constant 0 : index
      %15 = vector.load %arg6[%c0_8, %c0_9, %c0_10] : memref<2x32x16xf32, #tpu.memory_space<vmem>>, vector<2x32x16xf32>
      %c0_11 = arith.constant 0 : index
      %c0_12 = arith.constant 0 : index
      %c0_13 = arith.constant 0 : index
      %16 = vector.load %arg10[%c0_11, %c0_12, %c0_13] : memref<1x32x1xf32, #tpu.memory_space<vmem>>, vector<1x32x1xf32>
      %17 = vector.broadcast %16 : vector<1x32x1xf32> to vector<2x32x16xf32>
      %18 = arith.mulf %5, %17 : vector<2x32x16xf32>
      %19 = arith.addf %15, %18 : vector<2x32x16xf32>
      %c0_14 = arith.constant 0 : index
      %c0_15 = arith.constant 0 : index
      %c0_16 = arith.constant 0 : index
      %20 = vector.load %arg11[%c0_14, %c0_15, %c0_16] : memref<1x32x1xf32, #tpu.memory_space<vmem>>, vector<1x32x1xf32>
      %21 = vector.broadcast %20 : vector<1x32x1xf32> to vector<2x32x16xf32>
      %22 = arith.addf %19, %21 : vector<2x32x16xf32>
      %cst_17 = arith.constant 0.000000e+00 : f32
      %23 = vector.broadcast %cst_17 : f32 to vector<2x32x16xf32>
      %24 = arith.maximumf %22, %23 : vector<2x32x16xf32>
      %c0_18 = arith.constant 0 : index
      %c0_19 = arith.constant 0 : index
      %c0_20 = arith.constant 0 : index
      %25 = vector.load %arg7[%c0_18, %c0_19, %c0_20] : memref<2x32x16xf32, #tpu.memory_space<vmem>>, vector<2x32x16xf32>
      tpu.vector_store %arg7[%c0_18, %c0_19, %c0_20], %24 {strides = array<i32>} : memref<2x32x16xf32, #tpu.memory_space<vmem>>, vector<2x32x16xf32>,
    } else {
    }
    return
  }
  func.func @transform_0(%arg0: i32, %arg1: i32) -> (i32, i32) {
    %c0_i32 = arith.constant 0 : i32
    %c0_i32_0 = arith.constant 0 : i32
    %c0_i32_1 = arith.constant 0 : i32
    return %c0_i32, %c0_i32_0 : i32, i32
  }
  func.func @transform_1(%arg0: i32, %arg1: i32) -> (i32, i32, i32) {
    %c0_i32 = arith.constant 0 : i32
    %c0_i32_0 = arith.constant 0 : i32
    %c0_i32_1 = arith.constant 0 : i32
    %c0_i32_2 = arith.constant 0 : i32
    return %c0_i32, %c0_i32_0, %c0_i32_1 : i32, i32, i32
  }
  func.func @transform_2(%arg0: i32, %arg1: i32) -> (i32, i32, i32) {
    %c0_i32 = arith.constant 0 : i32
    %c0_i32_0 = arith.constant 0 : i32
    %c0_i32_1 = arith.constant 0 : i32
    %c0_i32_2 = arith.constant 0 : i32
    return %c0_i32, %c0_i32_0, %c0_i32_1 : i32, i32, i32
  }
  func.func @transform_3(%arg0: i32, %arg1: i32) -> (i32, i32, i32) {
    %c0_i32 = arith.constant 0 : i32
    %c0_i32_0 = arith.constant 0 : i32
    %c0_i32_1 = arith.constant 0 : i32
    return %c0_i32, %c0_i32_0, %arg1 : i32, i32, i32
  }
  func.func @transform_4(%arg0: i32, %arg1: i32) -> (i32, i32, i32) {
    %0 = arith.muli %arg1, %arg0 : i32
    %c0_i32 = arith.constant 0 : i32
    %c0_i32_0 = arith.constant 0 : i32
    %c0_i32_1 = arith.constant 0 : i32
    return %c0_i32, %c0_i32_0, %0 : i32, i32, i32
  }
  func.func @transform_5(%arg0: i32, %arg1: i32) -> (i32, i32, i32) {
    %0 = arith.muli %arg1, %arg0 : i32
    %c0_i32 = arith.constant 0 : i32
    %c0_i32_0 = arith.constant 0 : i32
    %c0_i32_1 = arith.constant 0 : i32
    return %c0_i32, %c0_i32_0, %0 : i32, i32, i32
  }
}

</mosaic_0001>

<llo_original>
// kernel: residual_forward.1
$region0: #{residual_forward.1}
  #allocation0 [shape = 'u32[]', space=smem, size = 0x4, offset = 0x4, fixed_abs, tag = 'smem constant byte address 0x4 - core index']
  #allocation1 [shape = 'u32[72,128]{1,0:T(1,128)}', space=vmem, size = 0x9000, scoped, tag = 'internal scratch']
  #allocation2 [shape = 'f32[1,32,1]{2,1,0:T(8,128)}', space=vmem, size = 0x4000, scoped, tag = 'scratch operand']
  #allocation3 [shape = 'f32[1,32,1]{2,1,0:T(8,128)}', space=vmem, size = 0x4000, scoped, tag = 'scratch operand']
  #allocation4 [shape = 'f32[1,32,1]{2,1,0:T(8,128)}', space=vmem, size = 0x4000, scoped, tag = 'scratch operand']
  #allocation5 [shape = 'f32[1,32,1]{2,1,0:T(8,128)}', space=vmem, size = 0x4000, scoped, tag = 'scratch operand']
  %s0 = inlined_call_operand.vmem [shape: f32[32,4], index: 0, kind: input, shape index: {}]
  %s1 = inlined_call_operand.vmem [shape: f32[1,32,1], index: 1, kind: input, shape index: {}]
  %s2 = inlined_call_operand.vmem [shape: f32[1,32,1], index: 2, kind: input, shape index: {}]
  %s3 = inlined_call_operand.vmem [shape: f32[2,4,16], index: 3, kind: input, shape index: {}]
  %s4 = inlined_call_operand.vmem [shape: f32[2,32,16], index: 4, kind: input, shape index: {}, may-alias: {4,5}]
  %s5 = inlined_call_operand.vmem [shape: f32[2,32,16], index: 5, kind: output, shape index: {}, may-alias: {4,5}]
  %s6 = sld [smem:[#allocation0]]
  $region69: #{residual_forward.1} parent=0
    _
  %s8 = ssub.s32 1, %s6
  %s9 = scalar_select 0, %s8, %s6
  loop: start=0, step=1, limit=4
  $region2: #{residual_forward.1} parent=0 // loop_pre_header
    _
  $region3: #{residual_forward.1} parent=0 // loop_header
    %s11 = sphi 0, %s15
    %p12 = scmp.ge.s32.totalorder %s11, 4
    %s18 = sphi 0, %s30
    %s19 = sphi 0, %s26
    %s20 = sphi 0, %s18
    %s21 = sphi 0, %s19
    %s22 = sphi 0, %s20
    %s23 = sphi 0, %s21
    %s31 = sphi 0, %s31
    %s33 = sphi 0, %s31
    %s34 = sphi 0, %s33
    %s48 = sphi 0, %s34
    %s52 = sphi 0, %s52
    %s54 = sphi 0, %s52
    %s55 = sphi 0, %s54
    %s69 = sphi 0, %s55
    %s73 = sphi 0, %s73
    %s75 = sphi 0, %s73
    %s76 = sphi 0, %s75
    %s90 = sphi 0, %s76
    %s96 = sphi 0, %s98
    %s99 = sphi 0, %s96
    %s100 = sphi 0, %s99
    %s116 = sphi 0, %s100
    %s124 = sphi 0, %s126
    %s127 = sphi 0, %s124
    %s128 = sphi 0, %s127
    %s144 = sphi 0, %s128
    %s152 = sphi 0, %s154
    %s155 = sphi 0, %s152
    %s156 = sphi 0, %s155
    %s172 = sphi 0, %s156
  $region4: #{residual_forward.1} parent=0 // loop_header_branch
    %14 = sbr.rel (%p12) target = $region8
  $region5: #{residual_forward.1} parent=0 // loop_body
    %s16 = ssub.s32 %s11, 1
    %s17 = ssub.s32 %s11, 2
    %s24 = sadd.s32 1, %s19
    %p25 = scmp.ge.s32.totalorder %s24, 1
    %s26 = scalar_select %p25, 0, %s24
    %s27 = sadd.s32 1, %s18
    %s28 = scalar_select %p25, %s27, %s18
    %p29 = scmp.ge.s32.totalorder %s28, 2
    %s30 = scalar_select %p29, 0, %s28
    %s32 = sadd.s32 %s31, 1
    %p35 = scmp.eq.s32.totalorder %s11, 1
    %p36 = scmp.ne.s32.totalorder %s31, %s33
    %p37 = scmp.eq.s32.totalorder %s11, 0
    %p38 = por %p36, %p37
    %p39 = scmp.ne.s32.totalorder %s31, %s33
    %p40 = scmp.eq.s32.totalorder %s16, 1
    %p41 = por %p39, %p40
    %p42 = scmp.ne.s32.totalorder %s33, %s34
    %p43 = scmp.eq.s32.totalorder %s16, 0
    %p44 = por %p42, %p43
    %p45 = scmp.ne.s32.totalorder %s33, %s34
    %p46 = scmp.eq.s32.totalorder %s17, 1
    %p47 = por %p45, %p46
    %p49 = scmp.ne.s32.totalorder %s34, %s48
    %p50 = scmp.eq.s32.totalorder %s17, 0
    %p51 = por %p49, %p50
    %s53 = sadd.s32 %s52, 1
    %p56 = scmp.eq.s32.totalorder %s11, 1
    %p57 = scmp.ne.s32.totalorder %s52, %s54
    %p58 = scmp.eq.s32.totalorder %s11, 0
    %p59 = por %p57, %p58
    %p60 = scmp.ne.s32.totalorder %s52, %s54
    %p61 = scmp.eq.s32.totalorder %s16, 1
    %p62 = por %p60, %p61
    %p63 = scmp.ne.s32.totalorder %s54, %s55
    %p64 = scmp.eq.s32.totalorder %s16, 0
    %p65 = por %p63, %p64
    %p66 = scmp.ne.s32.totalorder %s54, %s55
    %p67 = scmp.eq.s32.totalorder %s17, 1
    %p68 = por %p66, %p67
    %p70 = scmp.ne.s32.totalorder %s55, %s69
    %p71 = scmp.eq.s32.totalorder %s17, 0
    %p72 = por %p70, %p71
    %s74 = sadd.s32 %s73, 1
    %p77 = scmp.eq.s32.totalorder %s11, 1
    %p78 = scmp.ne.s32.totalorder %s73, %s75
    %p79 = scmp.eq.s32.totalorder %s11, 0
    %p80 = por %p78, %p79
    %p81 = scmp.ne.s32.totalorder %s73, %s75
    %p82 = scmp.eq.s32.totalorder %s16, 1
    %p83 = por %p81, %p82
    %p84 = scmp.ne.s32.totalorder %s75, %s76
    %p85 = scmp.eq.s32.totalorder %s16, 0
    %p86 = por %p84, %p85
    %p87 = scmp.ne.s32.totalorder %s75, %s76
    %p88 = scmp.eq.s32.totalorder %s17, 1
    %p89 = por %p87, %p88
    %p91 = scmp.ne.s32.totalorder %s76, %s90
    %p92 = scmp.eq.s32.totalorder %s17, 0
    %p93 = por %p91, %p92
    %s94 = ssub.s32 %s19, %s26
    %p95 = scmp.eq.s32.totalorder %s94, 0
    %s97 = sadd.s32 %s96, 1
    %s98 = scalar_select %p95, %s96, %s97
    %p101 = pneg %p95
    %p102 = scmp.eq.s32.totalorder %s11, 1
    %p103 = por %p101, %p102
    %p104 = scmp.ne.s32.totalorder %s96, %s99
    %p105 = scmp.eq.s32.totalorder %s11, 0
    %p106 = por %p104, %p105
    %p107 = scmp.ne.s32.totalorder %s96, %s99
    %p108 = scmp.eq.s32.totalorder %s16, 1
    %p109 = por %p107, %p108
    %p110 = scmp.ne.s32.totalorder %s99, %s100
    %p111 = scmp.eq.s32.totalorder %s16, 0
    %p112 = por %p110, %p111
    %p113 = scmp.ne.s32.totalorder %s99, %s100
    %p114 = scmp.eq.s32.totalorder %s17, 1
    %p115 = por %p113, %p114
    %p117 = scmp.ne.s32.totalorder %s100, %s116
    %p118 = scmp.eq.s32.totalorder %s17, 0
    %p119 = por %p117, %p118
    %s120 = smul.u32 %s19, %s18
    %s121 = smul.u32 %s26, %s30
    %s122 = ssub.s32 %s120, %s121
    %p123 = scmp.eq.s32.totalorder %s122, 0
    %s125 = sadd.s32 %s124, 1
    %s126 = scalar_select %p123, %s124, %s125
    %p129 = pneg %p123
    %p130 = scmp.eq.s32.totalorder %s11, 1
    %p131 = por %p129, %p130
    %p132 = scmp.ne.s32.totalorder %s124, %s127
    %p133 = scmp.eq.s32.totalorder %s11, 0
    %p134 = por %p132, %p133
    %p135 = scmp.ne.s32.totalorder %s124, %s127
    %p136 = scmp.eq.s32.totalorder %s16, 1
    %p137 = por %p135, %p136
    %p138 = scmp.ne.s32.totalorder %s127, %s128
    %p139 = scmp.eq.s32.totalorder %s16, 0
    %p140 = por %p138, %p139
    %p141 = scmp.ne.s32.totalorder %s127, %s128
    %p142 = scmp.eq.s32.totalorder %s17, 1
    %p143 = por %p141, %p142
    %p145 = scmp.ne.s32.totalorder %s128, %s144
    %p146 = scmp.eq.s32.totalorder %s17, 0
    %p147 = por %p145, %p146
    %s148 = smul.u32 %s19, %s18
    %s149 = smul.u32 %s26, %s30
    %s150 = ssub.s32 %s148, %s149
    %p151 = scmp.eq.s32.totalorder %s150, 0
    %s153 = sadd.s32 %s152, 1
    %s154 = scalar_select %p151, %s152, %s153
    %p157 = pneg %p151
    %p158 = scmp.eq.s32.totalorder %s11, 1
    %p159 = por %p157, %p158
    %p160 = scmp.ne.s32.totalorder %s152, %s155
    %p161 = scmp.eq.s32.totalorder %s11, 0
    %p162 = por %p160, %p161
    %p163 = scmp.ne.s32.totalorder %s152, %s155
    %p164 = scmp.eq.s32.totalorder %s16, 1
    %p165 = por %p163, %p164
    %p166 = scmp.ne.s32.totalorder %s155, %s156
    %p167 = scmp.eq.s32.totalorder %s16, 0
    %p168 = por %p166, %p167
    %p169 = scmp.ne.s32.totalorder %s155, %s156
    %p170 = scmp.eq.s32.totalorder %s17, 1
    %p171 = por %p169, %p170
    %p173 = scmp.ne.s32.totalorder %s156, %s172
    %p174 = scmp.eq.s32.totalorder %s17, 0
    %p175 = por %p173, %p174
    %p176 = scmp.le.s32.totalorder 1, %s11
    %p177 = scmp.lt.s32.totalorder %s11, 3
    %p178 = pnand %p176, %p177
    %p179 = pneg %p178
    // Predicated region
    $region9: #{residual_forward.1} parent=5 // pred_check
      _
    $region10: #{residual_forward.1} parent=5 // pred_check_branch
      %181 = sbr.rel (%p178) target = $region12
    $region11: #{residual_forward.1} parent=5 // pred_region
      %s182 = ssub.s32 %s11, 1
      // Predicated region
      $region13: #{residual_forward.1} parent=11 // pred_check
        %p183 = pneg %p44
      $region14: #{residual_forward.1} parent=11 // pred_check_branch
        %185 = sbr.rel (%p183) target = $region16
      $region15: #{residual_forward.1} parent=11 // pred_region
        _
      $region16: #{residual_forward.1} parent=11 // pred_fallthru
        _
      // Predicated region
      $region17: #{residual_forward.1} parent=11 // pred_check
        %p186 = pneg %p65
      $region18: #{residual_forward.1} parent=11 // pred_check_branch
        %188 = sbr.rel (%p186) target = $region20
      $region19: #{residual_forward.1} parent=11 // pred_region
        _
      $region20: #{residual_forward.1} parent=11 // pred_fallthru
        _
      // Predicated region
      $region21: #{residual_forward.1} parent=11 // pred_check
        %p189 = pneg %p86
      $region22: #{residual_forward.1} parent=11 // pred_check_branch
        %191 = sbr.rel (%p189) target = $region24
      $region23: #{residual_forward.1} parent=11 // pred_region
        _
      $region24: #{residual_forward.1} parent=11 // pred_fallthru
        _
      // Predicated region
      $region25: #{residual_forward.1} parent=11 // pred_check
        %p192 = pneg %p112
      $region26: #{residual_forward.1} parent=11 // pred_check_branch
        %194 = sbr.rel (%p192) target = $region28
      $region27: #{residual_forward.1} parent=11 // pred_region
        %p195 = scmp.lt.s32.totalorder %s21, 0
        %s196 = scalar_select %p195, %s21, 0
        %s197 = smul.addr %s196, 4
        %s198 = scalar_lea.vmem %s3, %s197
      $region28: #{residual_forward.1} parent=11 // pred_fallthru
        _
    $region12: #{residual_forward.1} parent=5 // pred_fallthru
      _
    %p199 = scmp.lt.s32.totalorder %s11, 2
    // Predicated region
    $region29: #{residual_forward.1} parent=5 // pred_check
      %p200 = pneg %p199
    $region30: #{residual_forward.1} parent=5 // pred_check_branch
      %202 = sbr.rel (%p200) target = $region32
    $region31: #{residual_forward.1} parent=5 // pred_region
      // Predicated region
      $region33: #{residual_forward.1} parent=31 // pred_check
        %p203 = pneg %p134
      $region34: #{residual_forward.1} parent=31 // pred_check_branch
        %205 = sbr.rel (%p203) target = $region36
      $region35: #{residual_forward.1} parent=31 // pred_region
        %s206 = smul.u32 %s19, %s18
        %p207 = scmp.lt.s32.totalorder %s206, 0
        %s208 = scalar_select %p207, %s206, 0
        %s209 = smul.addr %s208, 8
        %s210 = scalar_lea.vmem %s4, %s209
        %s211 = smul.u32 %s19, %s18
      $region36: #{residual_forward.1} parent=31 // pred_fallthru
        _
    $region32: #{residual_forward.1} parent=5 // pred_fallthru
      _
    %p212 = scmp.le.s32.totalorder 1, %s11
    %p213 = scmp.lt.s32.totalorder %s11, 3
    %p214 = pnand %p212, %p213
    %p215 = pneg %p214
    // Predicated region
    $region37: #{residual_forward.1} parent=5 // pred_check
      _
    $region38: #{residual_forward.1} parent=5 // pred_check_branch
      %217 = sbr.rel (%p214) target = $region40
    $region39: #{residual_forward.1} parent=5 // pred_region
      %s218 = ssub.s32 %s11, 1
      %p219 = pneg %p44
      %p220 = pneg %p41
      %p221 = pneg %p65
      %p222 = pneg %p62
      %p223 = pneg %p86
      %p224 = pneg %p83
      %p225 = scmp.lt.s32.totalorder %s21, 0
      %s226 = scalar_select %p225, %s21, 0
      %s227 = smul.addr %s226, 4
      %s228 = scalar_lea.vmem %s3, %s227
      %p229 = pneg %p112
      %p230 = pneg %p109
      %s231 = smul.u32 %s21, %s20
      %p232 = scmp.lt.s32.totalorder %s231, 0
      %s233 = scalar_select %p232, %s231, 0
      %s234 = smul.addr %s233, 8
      %s235 = scalar_lea.vmem %s4, %s234
      %p236 = pneg %p140
      %p237 = pneg %p137
      %p238 = pneg %p168
      %p239 = pneg %p165
      %s240 = smul.u32 %s21, %s20
      %p241 = scmp.lt.s32.totalorder %s240, 0
      %s242 = scalar_select %p241, %s240, 0
      %s243 = smul.addr %s242, 8
      %s244 = scalar_lea.vmem %s5, %s243
      %p245 = scmp.lt.s32.totalorder %s21, 0
      %s246 = scalar_select %p245, %s21, 0
      %s247 = smul.addr %s246, 4
      %s248 = scalar_lea.vmem %s3, %s247
      %s249 = smul.u32 %s21, %s20
      %p250 = scmp.lt.s32.totalorder %s249, 0
      %s251 = scalar_select %p250, %s249, 0
      %s252 = smul.addr %s251, 8
      %s253 = scalar_lea.vmem %s4, %s252
      %s254 = smul.u32 %s21, %s20
      %s255 = smul.u32 %s21, %s20
      %p256 = scmp.lt.s32.totalorder %s255, 0
      %s257 = scalar_select %p256, %s255, 0
      %s258 = smul.addr %s257, 8
      %s259 = scalar_lea.vmem %s5, %s258
      %s260 = smul.u32 %s21, %s20
      %v261 = vld [vmem:[%s0] sm:$0xff]
      %v262 = vld [vmem:[%s0 + $0x8] sm:$0xff]
      %v263 = vld [vmem:[%s0 + $0x10] sm:$0xff]
      %v264 = vld [vmem:[%s0 + $0x18] sm:$0xff]
      %v265 = vld [vmem:[%s248] sm:$0xf]
      %v266 = vld [vmem:[%s248 + $0x4] sm:$0xf]
      %vm267 = vcmask 31744
      %v269 = vsel %vm267, %v261, 0
      %v272 = vsel %vm267, %v262, 0
      %v275 = vsel %vm267, %v263, 0
      %v278 = vsel %vm267, %v264, 0
      %vm280 = vcmask 1043456
      %v282 = vsel %vm280, %v265, 0
      %284 = vmatpush.msra.mxu0 0.0
      %285 = vmatpush.msra.mxu0 0.0
      %286 = vmatpush.msra.mxu0 0.0
      %287 = vmatpush.msra.mxu0 0.0
      %288 = vmatpush.msra.mxu0 0.0
      %289 = vmatpush.msra.mxu0 0.0
      %290 = vmatpush.msra.mxu0 0.0
      %291 = vmatpush.msra.mxu0 0.0
      %292 = vmatpush.msra.mxu0 0.0
      %293 = vmatpush.msra.mxu0 0.0
      %294 = vmatpush.msra.mxu0 0.0
      %295 = vmatpush.msra.mxu0 0.0
      %296 = vmatpush.msra.mxu0 0.0
      %297 = vmatpush.msra.mxu0 0.0
      %298 = vmatpush.msra.mxu0 0.0
      %299 = vmatpush.msra.mxu0 %v282
      %300 = vmatmul.f32.gmra.mxu0 %v269
      %v301 = vpop.f32.mrf.mxu0
      %v302 = vadd.f32 0.0, %v301
      %303 = vmatmul.f32.gmra.mxu0 %v272
      %v304 = vpop.f32.mrf.mxu0
      %v305 = vadd.f32 0.0, %v304
      %306 = vmatmul.f32.gmra.mxu0 %v275
      %v307 = vpop.f32.mrf.mxu0
      %v308 = vadd.f32 0.0, %v307
      %309 = vmatmul.f32.gmra.mxu0 %v278
      %v310 = vpop.f32.mrf.mxu0
      %v311 = vadd.f32 0.0, %v310
      %312 = vdwg.mxu0
      %v314 = vsel %vm280, %v266, 0
      %316 = vmatpush.msra.mxu0 0.0
      %317 = vmatpush.msra.mxu0 0.0
      %318 = vmatpush.msra.mxu0 0.0
      %319 = vmatpush.msra.mxu0 0.0
      %320 = vmatpush.msra.mxu0 0.0
      %321 = vmatpush.msra.mxu0 0.0
      %322 = vmatpush.msra.mxu0 0.0
      %323 = vmatpush.msra.mxu0 0.0
      %324 = vmatpush.msra.mxu0 0.0
      %325 = vmatpush.msra.mxu0 0.0
      %326 = vmatpush.msra.mxu0 0.0
      %327 = vmatpush.msra.mxu0 0.0
      %328 = vmatpush.msra.mxu0 0.0
      %329 = vmatpush.msra.mxu0 0.0
      %330 = vmatpush.msra.mxu0 0.0
      %331 = vmatpush.msra.mxu0 %v314
      %332 = vmatmul.f32.gmra.mxu0 %v269
      %v333 = vpop.f32.mrf.mxu0
      %v334 = vadd.f32 0.0, %v333
      %335 = vmatmul.f32.gmra.mxu0 %v272
      %v336 = vpop.f32.mrf.mxu0
      %v337 = vadd.f32 0.0, %v336
      %338 = vmatmul.f32.gmra.mxu0 %v275
      %v339 = vpop.f32.mrf.mxu0
      %v340 = vadd.f32 0.0, %v339
      %341 = vmatmul.f32.gmra.mxu0 %v278
      %v342 = vpop.f32.mrf.mxu0
      %v343 = vadd.f32 0.0, %v342
      %344 = vdwg.mxu0
      %p345 = scmp.eq.s32.totalorder %s20, 0
      // Predicated region
      $region41: #{residual_forward.1} parent=39 // pred_check
        %p346 = pneg %p345
      $region42: #{residual_forward.1} parent=39 // pred_check_branch
        %348 = sbr.rel (%p346) target = $region44
      $region43: #{residual_forward.1} parent=39 // pred_region
        %p349 = scmp.eq.s32.totalorder %s21, 0
        // Predicated region
        $region45: #{residual_forward.1} parent=43 // pred_check
          %p350 = pneg %p349
        $region46: #{residual_forward.1} parent=43 // pred_check_branch
          %352 = sbr.rel (%p350) target = $region48
        $region47: #{residual_forward.1} parent=43 // pred_region
          %vm353 = vcmask 7168
          %354 = vst.msk [vmem:[#allocation2] sm:$0xff] %vm353, 0.0
          %355 = vst.msk [vmem:[#allocation2 + $0x8] sm:$0xff] %vm353, 0.0
          %356 = vst.msk [vmem:[#allocation2 + $0x10] sm:$0xff] %vm353, 0.0
          %357 = vst.msk [vmem:[#allocation2 + $0x18] sm:$0xff] %vm353, 0.0
          %358 = vst.msk [vmem:[#allocation3] sm:$0xff] %vm353, 0.0
          %359 = vst.msk [vmem:[#allocation3 + $0x8] sm:$0xff] %vm353, 0.0
          %360 = vst.msk [vmem:[#allocation3 + $0x10] sm:$0xff] %vm353, 0.0
          %361 = vst.msk [vmem:[#allocation3 + $0x18] sm:$0xff] %vm353, 0.0
        $region48: #{residual_forward.1} parent=43 // pred_fallthru
          _
        %vm362 = vcmask 130048
        %v363 = vsel %vm362, %v302, 0.0
        %364 = vadd.xlane.f32.xlu0 %v363
        %v365 = vpop.xlane.xlu0 %364
        %v366 = vsel %vm362, %v305, 0.0
        %367 = vadd.xlane.f32.xlu0 %v366
        %v368 = vpop.xlane.xlu0 %367
        %v369 = vsel %vm362, %v308, 0.0
        %370 = vadd.xlane.f32.xlu0 %v369
        %v371 = vpop.xlane.xlu0 %370
        %v372 = vsel %vm362, %v311, 0.0
        %373 = vadd.xlane.f32.xlu0 %v372
        %v374 = vpop.xlane.xlu0 %373
        %v375 = vsel %vm362, %v334, 0.0
        %376 = vadd.xlane.f32.xlu0 %v375
        %v377 = vpop.xlane.xlu0 %376
        %v378 = vsel %vm362, %v337, 0.0
        %379 = vadd.xlane.f32.xlu0 %v378
        %v380 = vpop.xlane.xlu0 %379
        %v381 = vsel %vm362, %v340, 0.0
        %382 = vadd.xlane.f32.xlu0 %v381
        %v383 = vpop.xlane.xlu0 %382
        %v384 = vsel %vm362, %v343, 0.0
        %385 = vadd.xlane.f32.xlu0 %v384
        %v386 = vpop.xlane.xlu0 %385
        %v387 = vmul.f32 %v302, %v302
        %v388 = vmul.f32 %v305, %v305
        %v389 = vmul.f32 %v308, %v308
        %v390 = vmul.f32 %v311, %v311
        %v391 = vmul.f32 %v334, %v334
        %v392 = vmul.f32 %v337, %v337
        %v393 = vmul.f32 %v340, %v340
        %v394 = vmul.f32 %v343, %v343
        %v395 = vsel %vm362, %v387, 0.0
        %396 = vadd.xlane.f32.xlu0 %v395
        %v397 = vpop.xlane.xlu0 %396
        %v398 = vsel %vm362, %v388, 0.0
        %399 = vadd.xlane.f32.xlu0 %v398
        %v400 = vpop.xlane.xlu0 %399
        %v401 = vsel %vm362, %v389, 0.0
        %402 = vadd.xlane.f32.xlu0 %v401
        %v403 = vpop.xlane.xlu0 %402
        %v404 = vsel %vm362, %v390, 0.0
        %405 = vadd.xlane.f32.xlu0 %v404
        %v406 = vpop.xlane.xlu0 %405
        %v407 = vsel %vm362, %v391, 0.0
        %408 = vadd.xlane.f32.xlu0 %v407
        %v409 = vpop.xlane.xlu0 %408
        %v410 = vsel %vm362, %v392, 0.0
        %411 = vadd.xlane.f32.xlu0 %v410
        %v412 = vpop.xlane.xlu0 %411
        %v413 = vsel %vm362, %v393, 0.0
        %414 = vadd.xlane.f32.xlu0 %v413
        %v415 = vpop.xlane.xlu0 %414
        %v416 = vsel %vm362, %v394, 0.0
        %417 = vadd.xlane.f32.xlu0 %v416
        %v418 = vpop.xlane.xlu0 %417
        %v419 = vld [vmem:[#allocation2] sm:$0xff]
        %v420 = vld [vmem:[#allocation2 + $0x8] sm:$0xff]
        %v421 = vld [vmem:[#allocation2 + $0x10] sm:$0xff]
        %v422 = vld [vmem:[#allocation2 + $0x18] sm:$0xff]
        %v423 = vadd.f32 %v365, %v377
        %v424 = vadd.f32 %v368, %v380
        %v425 = vadd.f32 %v371, %v383
        %v426 = vadd.f32 %v374, %v386
        %v427 = vadd.f32 %v419, %v423
        %v428 = vadd.f32 %v420, %v424
        %v429 = vadd.f32 %v421, %v425
        %v430 = vadd.f32 %v422, %v426
        %vm431 = vcmask 7168
        %432 = vst.msk [vmem:[#allocation2] sm:$0xff] %vm431, %v427
        %433 = vst.msk [vmem:[#allocation2 + $0x8] sm:$0xff] %vm431, %v428
        %434 = vst.msk [vmem:[#allocation2 + $0x10] sm:$0xff] %vm431, %v429
        %435 = vst.msk [vmem:[#allocation2 + $0x18] sm:$0xff] %vm431, %v430
        %v436 = vld [vmem:[#allocation3] sm:$0xff]
        %v437 = vld [vmem:[#allocation3 + $0x8] sm:$0xff]
        %v438 = vld [vmem:[#allocation3 + $0x10] sm:$0xff]
        %v439 = vld [vmem:[#allocation3 + $0x18] sm:$0xff]
        %v440 = vadd.f32 %v397, %v409
        %v441 = vadd.f32 %v400, %v412
        %v442 = vadd.f32 %v403, %v415
        %v443 = vadd.f32 %v406, %v418
        %v444 = vadd.f32 %v436, %v440
        %v445 = vadd.f32 %v437, %v441
        %v446 = vadd.f32 %v438, %v442
        %v447 = vadd.f32 %v439, %v443
        %448 = vst.msk [vmem:[#allocation3] sm:$0xff] %vm431, %v444
        %449 = vst.msk [vmem:[#allocation3 + $0x8] sm:$0xff] %vm431, %v445
        %450 = vst.msk [vmem:[#allocation3 + $0x10] sm:$0xff] %vm431, %v446
        %451 = vst.msk [vmem:[#allocation3 + $0x18] sm:$0xff] %vm431, %v447
      $region44: #{residual_forward.1} parent=39 // pred_fallthru
        _
      %p452 = scmp.eq.s32.totalorder %s20, 1
      // Predicated region
      $region49: #{residual_forward.1} parent=39 // pred_check
        %p453 = pneg %p452
      $region50: #{residual_forward.1} parent=39 // pred_check_branch
        %455 = sbr.rel (%p453) target = $region52
      $region51: #{residual_forward.1} parent=39 // pred_region
        %p456 = scmp.eq.s32.totalorder %s21, 0
        // Predicated region
        $region53: #{residual_forward.1} parent=51 // pred_check
          %p457 = pneg %p456
        $region54: #{residual_forward.1} parent=51 // pred_check_branch
          %459 = sbr.rel (%p457) target = $region56
        $region55: #{residual_forward.1} parent=51 // pred_region
          %v460 = vld [vmem:[#allocation2] sm:$0xff]
          %v461 = vld [vmem:[#allocation2 + $0x8] sm:$0xff]
          %v462 = vld [vmem:[#allocation2 + $0x10] sm:$0xff]
          %v463 = vld [vmem:[#allocation2 + $0x18] sm:$0xff]
          %v464 = vmul.f32 %v460, 0.03125
          %v465 = vmul.f32 %v461, 0.03125
          %v466 = vmul.f32 %v462, 0.03125
          %v467 = vmul.f32 %v463, 0.03125
          %v468 = vld [vmem:[#allocation3] sm:$0xff]
          %v469 = vld [vmem:[#allocation3 + $0x8] sm:$0xff]
          %v470 = vld [vmem:[#allocation3 + $0x10] sm:$0xff]
          %v471 = vld [vmem:[#allocation3 + $0x18] sm:$0xff]
          %v472 = vmul.f32 %v468, 0.03125
          %v473 = vmul.f32 %v469, 0.03125
          %v474 = vmul.f32 %v470, 0.03125
          %v475 = vmul.f32 %v471, 0.03125
          %v476 = vmul.f32 %v464, %v464
          %v477 = vmul.f32 %v465, %v465
          %v478 = vmul.f32 %v466, %v466
          %v479 = vmul.f32 %v467, %v467
          %v480 = vsub.f32 %v472, %v476
          %v481 = vsub.f32 %v473, %v477
          %v482 = vsub.f32 %v474, %v478
          %v483 = vsub.f32 %v475, %v479
          %v484 = vmax.f32 %v480, 0.0
          %v485 = vmax.f32 %v481, 0.0
          %v486 = vmax.f32 %v482, 0.0
          %v487 = vmax.f32 %v483, 0.0
          %v488 = vadd.f32 %v484, 1e-05
          %v489 = vadd.f32 %v485, 1e-05
          %v490 = vadd.f32 %v486, 1e-05
          %v491 = vadd.f32 %v487, 1e-05
          %v492 = vrsqrt.pop %v488
          %v493 = vmul.f32 %v492, %v488
          %v494 = vmul.f32 %v493, %v492
          %v495 = vmul.f32 0.5, %v494
          %v496 = vsub.f32 1.5, %v495
          %v497 = vmul.f32 %v492, %v496
          %vm498 = vweird.f32 %v488
          %vm499 = vweird.f32 %v492
          %vm500 = vmor %vm498, %vm499
          %v501 = vsel %vm500, %v492, %v497
          %v502 = vrsqrt.pop %v489
          %v503 = vmul.f32 %v502, %v489
          %v504 = vmul.f32 %v503, %v502
          %v505 = vmul.f32 0.5, %v504
          %v506 = vsub.f32 1.5, %v505
          %v507 = vmul.f32 %v502, %v506
          %vm508 = vweird.f32 %v489
          %vm509 = vweird.f32 %v502
          %vm510 = vmor %vm508, %vm509
          %v511 = vsel %vm510, %v502, %v507
          %v512 = vrsqrt.pop %v490
          %v513 = vmul.f32 %v512, %v490
          %v514 = vmul.f32 %v513, %v512
          %v515 = vmul.f32 0.5, %v514
          %v516 = vsub.f32 1.5, %v515
          %v517 = vmul.f32 %v512, %v516
          %vm518 = vweird.f32 %v490
          %vm519 = vweird.f32 %v512
          %vm520 = vmor %vm518, %vm519
          %v521 = vsel %vm520, %v512, %v517
          %v522 = vrsqrt.pop %v491
          %v523 = vmul.f32 %v522, %v491
          %v524 = vmul.f32 %v523, %v522
          %v525 = vmul.f32 0.5, %v524
          %v526 = vsub.f32 1.5, %v525
          %v527 = vmul.f32 %v522, %v526
          %vm528 = vweird.f32 %v491
          %vm529 = vweird.f32 %v522
          %vm530 = vmor %vm528, %vm529
          %v531 = vsel %vm530, %v522, %v527
          %v532 = vld [vmem:[%s1] sm:$0xff]
          %v533 = vld [vmem:[%s1 + $0x8] sm:$0xff]
          %v534 = vld [vmem:[%s1 + $0x10] sm:$0xff]
          %v535 = vld [vmem:[%s1 + $0x18] sm:$0xff]
          %v536 = vmul.f32 %v532, %v501
          %v537 = vmul.f32 %v533, %v511
          %v538 = vmul.f32 %v534, %v521
          %v539 = vmul.f32 %v535, %v531
          %vm540 = vcmask 7168
          %541 = vst.msk [vmem:[#allocation4] sm:$0xff] %vm540, %v536
          %542 = vst.msk [vmem:[#allocation4 + $0x8] sm:$0xff] %vm540, %v537
          %543 = vst.msk [vmem:[#allocation4 + $0x10] sm:$0xff] %vm540, %v538
          %544 = vst.msk [vmem:[#allocation4 + $0x18] sm:$0xff] %vm540, %v539
          %v545 = vld [vmem:[%s2] sm:$0xff]
          %v546 = vld [vmem:[%s2 + $0x8] sm:$0xff]
          %v547 = vld [vmem:[%s2 + $0x10] sm:$0xff]
          %v548 = vld [vmem:[%s2 + $0x18] sm:$0xff]
          %v549 = vmul.f32 %v464, %v536
          %v550 = vmul.f32 %v465, %v537
          %v551 = vmul.f32 %v466, %v538
          %v552 = vmul.f32 %v467, %v539
          %v553 = vsub.f32 %v545, %v549
          %v554 = vsub.f32 %v546, %v550
          %v555 = vsub.f32 %v547, %v551
          %v556 = vsub.f32 %v548, %v552
          %557 = vst.msk [vmem:[#allocation5] sm:$0xff] %vm540, %v553
          %558 = vst.msk [vmem:[#allocation5 + $0x8] sm:$0xff] %vm540, %v554
          %559 = vst.msk [vmem:[#allocation5 + $0x10] sm:$0xff] %vm540, %v555
          %560 = vst.msk [vmem:[#allocation5 + $0x18] sm:$0xff] %vm540, %v556
        $region56: #{residual_forward.1} parent=51 // pred_fallthru
          _
        %v561 = vld [vmem:[%s253] sm:$0xff]
        %v562 = vld [vmem:[%s253 + $0x8] sm:$0xff]
        %v563 = vld [vmem:[%s253 + $0x10] sm:$0xff]
        %v564 = vld [vmem:[%s253 + $0x18] sm:$0xff]
        %v565 = vld [vmem:[%s253 + $0x20] sm:$0xff]
        %v566 = vld [vmem:[%s253 + $0x28] sm:$0xff]
        %v567 = vld [vmem:[%s253 + $0x30] sm:$0xff]
        %v568 = vld [vmem:[%s253 + $0x38] sm:$0xff]
        %v569 = vld [vmem:[#allocation4] sm:$0xff]
        %v570 = vld [vmem:[#allocation4 + $0x8] sm:$0xff]
        %v571 = vld [vmem:[#allocation4 + $0x10] sm:$0xff]
        %v572 = vld [vmem:[#allocation4 + $0x18] sm:$0xff]
        %574 = vset.pattern.permute.xlu0 0
        %575 = vperm.xlu0 %574, %v569
        %v576 = vpop.permute.xlu0 %575
        %579 = vset.pattern.permute.xlu0 0
        %580 = vperm.xlu0 %579, %v570
        %v581 = vpop.permute.xlu0 %580
        %584 = vset.pattern.permute.xlu0 0
        %585 = vperm.xlu0 %584, %v571
        %v586 = vpop.permute.xlu0 %585
        %589 = vset.pattern.permute.xlu0 0
        %590 = vperm.xlu0 %589, %v572
        %v591 = vpop.permute.xlu0 %590
        %v593 = vmul.f32 %v302, %v576
        %v594 = vmul.f32 %v305, %v581
        %v595 = vmul.f32 %v308, %v586
        %v596 = vmul.f32 %v311, %v591
        %v597 = vmul.f32 %v334, %v576
        %v598 = vmul.f32 %v337, %v581
        %v599 = vmul.f32 %v340, %v586
        %v600 = vmul.f32 %v343, %v591
        %v601 = vadd.f32 %v561, %v593
        %v602 = vadd.f32 %v562, %v594
        %v603 = vadd.f32 %v563, %v595
        %v604 = vadd.f32 %v564, %v596
        %v605 = vadd.f32 %v565, %v597
        %v606 = vadd.f32 %v566, %v598
        %v607 = vadd.f32 %v567, %v599
        %v608 = vadd.f32 %v568, %v600
        %v609 = vld [vmem:[#allocation5] sm:$0xff]
        %v610 = vld [vmem:[#allocation5 + $0x8] sm:$0xff]
        %v611 = vld [vmem:[#allocation5 + $0x10] sm:$0xff]
        %v612 = vld [vmem:[#allocation5 + $0x18] sm:$0xff]
        %614 = vset.pattern.permute.xlu0 0
        %615 = vperm.xlu0 %614, %v609
        %v616 = vpop.permute.xlu0 %615
        %619 = vset.pattern.permute.xlu0 0
        %620 = vperm.xlu0 %619, %v610
        %v621 = vpop.permute.xlu0 %620
        %624 = vset.pattern.permute.xlu0 0
        %625 = vperm.xlu0 %624, %v611
        %v626 = vpop.permute.xlu0 %625
        %629 = vset.pattern.permute.xlu0 0
        %630 = vperm.xlu0 %629, %v612
        %v631 = vpop.permute.xlu0 %630
        %v633 = vadd.f32 %v601, %v616
        %v634 = vadd.f32 %v602, %v621
        %v635 = vadd.f32 %v603, %v626
        %v636 = vadd.f32 %v604, %v631
        %v637 = vadd.f32 %v605, %v616
        %v638 = vadd.f32 %v606, %v621
        %v639 = vadd.f32 %v607, %v626
        %v640 = vadd.f32 %v608, %v631
        %v641 = vmax.f32 %v633, 0.0
        %v642 = vmax.f32 %v634, 0.0
        %v643 = vmax.f32 %v635, 0.0
        %v644 = vmax.f32 %v636, 0.0
        %v645 = vmax.f32 %v637, 0.0
        %v646 = vmax.f32 %v638, 0.0
        %v647 = vmax.f32 %v639, 0.0
        %v648 = vmax.f32 %v640, 0.0
        %vm649 = vcmask 130048
        %650 = vst.msk [vmem:[%s259] sm:$0xff] %vm649, %v641
        %651 = vst.msk [vmem:[%s259 + $0x8] sm:$0xff] %vm649, %v642
        %652 = vst.msk [vmem:[%s259 + $0x10] sm:$0xff] %vm649, %v643
        %653 = vst.msk [vmem:[%s259 + $0x18] sm:$0xff] %vm649, %v644
        %654 = vst.msk [vmem:[%s259 + $0x20] sm:$0xff] %vm649, %v645
        %655 = vst.msk [vmem:[%s259 + $0x28] sm:$0xff] %vm649, %v646
        %656 = vst.msk [vmem:[%s259 + $0x30] sm:$0xff] %vm649, %v647
        %657 = vst.msk [vmem:[%s259 + $0x38] sm:$0xff] %vm649, %v648
      $region52: #{residual_forward.1} parent=39 // pred_fallthru
        _
      %s658 = smul.u32 %s21, %s20
      %p659 = scmp.lt.s32.totalorder %s658, 0
      %s660 = scalar_select %p659, %s658, 0
      %s661 = smul.addr %s660, 8
      %s662 = scalar_lea.vmem %s5, %s661
      // Predicated region
      $region57: #{residual_forward.1} parent=39 // pred_check
        %p663 = pneg %p165
      $region58: #{residual_forward.1} parent=39 // pred_check_branch
        %665 = sbr.rel (%p663) target = $region60
      $region59: #{residual_forward.1} parent=39 // pred_region
        %s666 = smul.u32 %s21, %s20
      $region60: #{residual_forward.1} parent=39 // pred_fallthru
        _
    $region40: #{residual_forward.1} parent=5 // pred_fallthru
      _
    %p667 = scmp.le.s32.totalorder 2, %s11
    // Predicated region
    $region61: #{residual_forward.1} parent=5 // pred_check
      %p668 = pneg %p667
    $region62: #{residual_forward.1} parent=5 // pred_check_branch
      %670 = sbr.rel (%p668) target = $region64
    $region63: #{residual_forward.1} parent=5 // pred_region
      %s671 = ssub.s32 %s11, 2
      // Predicated region
      $region65: #{residual_forward.1} parent=63 // pred_check
        %p672 = pneg %p171
      $region66: #{residual_forward.1} parent=63 // pred_check_branch
        %674 = sbr.rel (%p672) target = $region68
      $region67: #{residual_forward.1} parent=63 // pred_region
        %s675 = smul.u32 %s23, %s22
        %p676 = scmp.lt.s32.totalorder %s675, 0
        %s677 = scalar_select %p676, %s675, 0
        %s678 = smul.addr %s677, 8
        %s679 = scalar_lea.vmem %s5, %s678
      $region68: #{residual_forward.1} parent=63 // pred_fallthru
        _
    $region64: #{residual_forward.1} parent=5 // pred_fallthru
      _
  $region6: #{residual_forward.1} parent=0 // loop_footer
    %s15 = sadd.s32 1, %s11
  $region7: #{residual_forward.1} parent=0 // loop_footer_branch
    %10 = sbr.rel target = $region3
  $region8: #{residual_forward.1} parent=0 // loop_exit
    _

</llo_original>
